<compile_context>
chip_gen: v7x
topology: tpu7x:2x2x1
jax: 0.10.0
libtpu: 0.0.40
codegen_flags: <defaults>
</compile_context>

<pallas_src>
import jax
import jax.numpy as jnp
from jax.experimental import pallas as pl
from jax.experimental.pallas import tpu as pltpu


def _round_up(n, m):
    return ((n + m - 1) // m) * m


def _pad2d(a, rows, cols):
    r, c = a.shape
    if r == rows and c == cols:
        return a
    return jnp.pad(a, ((0, rows - r), (0, cols - c)))


def _pad_cols(a, cols):
    c = a.shape[1]
    if c == cols:
        return a
    return jnp.pad(a, ((0, 0), (0, cols - c)))


# --------------------------------------------------------------------------- #
# Kernel: 2 MXU matmuls + VPU ReLU / FiLM on lane-dense (128-multiple) tiles.
# --------------------------------------------------------------------------- #
def film_kernel(x_ref, cell_ref, w1_ref, b1_ref, w2_ref, b2_ref, out_ref):
    # Linear1 + ReLU (bf16/f32 MXU inputs, f32 accumulate, f32 elementwise).
    h = jnp.dot(cell_ref[...], w1_ref[...],
                preferred_element_type=jnp.float32) + b1_ref[...]
    h = jnp.maximum(h, 0.0)
    # Linear2: gamma|beta fused into one [block_b, 2*D_p] matmul.
    gb = jnp.dot(h.astype(w2_ref.dtype), w2_ref[...],
                 preferred_element_type=jnp.float32) + b2_ref[...]
    d = out_ref.shape[-1]                       # static, multiple of 128
    out_ref[...] = gb[:, :d] * x_ref[...] + gb[:, d:]      # FiLM


# --------------------------------------------------------------------------- #
# One-time parameter preprocessing (cache the fused / padded / cast weights).
# --------------------------------------------------------------------------- #
def prepare_film_params(params, out_dim, matmul_dtype=jnp.bfloat16):
    w1, b1, w2, b2 = params["w1"], params["b1"], params["w2"], params["b2"]
    F = w1.shape[0]
    F_p = _round_up(F, 128)
    D_p = _round_up(out_dim, 128)

    w1_t = _pad2d(w1.T, F_p, F_p).astype(matmul_dtype)                 # [F_p, F_p]
    w2g_t = _pad2d(w2[:out_dim, :].T, F_p, D_p)
    w2b_t = _pad2d(w2[out_dim:, :].T, F_p, D_p)
    w2_t = jnp.concatenate([w2g_t, w2b_t], axis=1).astype(matmul_dtype)  # [F_p, 2*D_p]
    b1_p = _pad2d(b1.reshape(1, F).astype(jnp.float32), 1, F_p)
    b2_p = jnp.concatenate(
        [_pad2d(b2[:out_dim].reshape(1, out_dim).astype(jnp.float32), 1, D_p),
         _pad2d(b2[out_dim:].reshape(1, out_dim).astype(jnp.float32), 1, D_p)],
        axis=1)                                                          # [1, 2*D_p]

    return {"w1_t": w1_t, "b1": b1_p, "w2_t": w2_t, "b2": b2_p,
            "out_dim": int(out_dim), "F": int(F), "F_p": int(F_p),
            "D_p": int(D_p), "mm_dtype": matmul_dtype}


# --------------------------------------------------------------------------- #
# pallas_call builder.
# --------------------------------------------------------------------------- #
def _build_film_call(B, block_b, F_p, D_p, mm_dtype, single_buffer_weights):
    mm_bytes = jnp.dtype(mm_dtype).itemsize

    # VMEM budget: weights single-buffered (constant index), activation tiles
    # double-buffered (cell streams at mm_dtype, x/out at f32), f32 temporaries
    # for h / gamma|beta plus the in-kernel bf16 copy of h, plus headroom.
    weight_bytes = (F_p * F_p + F_p * 2 * D_p) * mm_bytes + (F_p + 2 * D_p) * 4
    act_bytes = block_b * (2 * D_p * 4 + F_p * mm_bytes)
    tmp_bytes = block_b * ((F_p + 2 * D_p) * 4 + F_p * mm_bytes)
    wmult = 1 if single_buffer_weights else 2
    vmem_limit = wmult * weight_bytes + 2 * act_bytes + 2 * tmp_bytes + (2 << 20)
    vmem_limit = int(min(max(vmem_limit, 4 << 20), 48 << 20))  # safe on v7x's 64 MiB

    w_kw = {"pipeline_mode": pl.Buffered(1)} if single_buffer_weights else {}
    grid = (pl.cdiv(B, block_b),)

    return pl.pallas_call(
        film_kernel,
        out_shape=jax.ShapeDtypeStruct((B, D_p), jnp.float32),
        grid_spec=pltpu.PrefetchScalarGridSpec(
            num_scalar_prefetch=0,
            grid=grid,
            in_specs=[
                pl.BlockSpec((block_b, D_p), lambda i: (i, 0)),        # x tile (f32)
                pl.BlockSpec((block_b, F_p), lambda i: (i, 0)),        # cell tile (mm_dtype)
                pl.BlockSpec((F_p, F_p), lambda i: (0, 0), **w_kw),    # W1^T (resident)
                pl.BlockSpec((1, F_p), lambda i: (0, 0), **w_kw),      # b1
                pl.BlockSpec((F_p, 2 * D_p), lambda i: (0, 0), **w_kw),  # [W2_g^T | W2_b^T]
                pl.BlockSpec((1, 2 * D_p), lambda i: (0, 0), **w_kw),  # [b2_g | b2_b]
            ],
            out_specs=pl.BlockSpec((block_b, D_p), lambda i: (i, 0)),
        ),
        compiler_params=pltpu.CompilerParams(
            dimension_semantics=("parallel",),
            vmem_limit_bytes=vmem_limit),
    )


# --------------------------------------------------------------------------- #
# Forward wrapper (matches the PyTorch module: returns [film_out, cell]).
# --------------------------------------------------------------------------- #
def film_with_feature_forward(x, cell, prepared, *, block_b=None):
    B, out_dim = x.shape
    assert out_dim == prepared["out_dim"]
    F_p, D_p = prepared["F_p"], prepared["D_p"]
    mm_dtype = prepared["mm_dtype"]

    # Lane padding only (no-op when already 128-aligned).  No batch/row padding:
    # the partial last row block is write-masked by Pallas and zero weight K
    # lanes annihilate any garbage rows on the matmul path.
    x_p = _pad_cols(x.astype(jnp.float32), D_p)
    cell_p = _pad_cols(cell.astype(mm_dtype), F_p)   # bf16 stream when mm_dtype is bf16

    if block_b is None:
        if B <= 1024:
            block_b = B          # single tile: no forced splits on single-TC v5e/v6e
        else:
            block_b = 512        # 8-aligned large tile near the HBM roofline
            steps = pl.cdiv(B, block_b)
            if steps > 1 and steps % 2 == 1:          # even step count for v7x's 2 TCs
                block_b = _round_up(-(-B // (steps + 1)), 8)
    block_b = int(block_b)

    args = (x_p, cell_p, prepared["w1_t"], prepared["b1"],
            prepared["w2_t"], prepared["b2"])
    try:
        out_p = _build_film_call(B, block_b, F_p, D_p, mm_dtype, True)(*args)
    except Exception:
        # pl.Buffered(1) (single-buffered resident weights) not supported by this
        # jax build -> fall back to default double-buffering (correctness-identical).
        out_p = _build_film_call(B, block_b, F_p, D_p, mm_dtype, False)(*args)

    out = out_p if D_p == out_dim else out_p[:, :out_dim]
    return [out, cell]


# --------------------------------------------------------------------------- #
# Test harness.
# --------------------------------------------------------------------------- #
def init_params(key, num_cell_line_features, out_dim):
    """Deterministic synthetic init matching the PyTorch parameter shapes."""
    F = num_cell_line_features
    k1, k2, k3, k4 = jax.random.split(key, 4)
    bound1 = 1.0 / jnp.sqrt(F)
    w1 = jax.random.uniform(k1, (F, F), jnp.float32, -bound1, bound1)            # Lin1.weight [out,in]
    b1 = jax.random.uniform(k2, (F,), jnp.float32, -bound1, bound1)              # Lin1.bias
    w2 = jax.random.uniform(k3, (2 * out_dim, F), jnp.float32, -bound1, bound1)  # Lin2.weight
    b2 = jax.random.uniform(k4, (2 * out_dim,), jnp.float32, -bound1, bound1)    # Lin2.bias
    # PyTorch: self.condit_lin_2.bias.data[:out_dim] += 1
    b2 = b2.at[:out_dim].add(1.0)
    return {"w1": w1, "b1": b1, "w2": w2, "b2": b2}


def reference_forward(x, cell, params):
    out_dim = x.shape[1]
    h = jnp.maximum(cell @ params["w1"].T + params["b1"], 0.0)
    c = h @ params["w2"].T + params["b2"]
    return c[:, :out_dim] * x + c[:, out_dim:]


def _run_case(key, B, F, out_dim, matmul_dtype, atol, rtol, block_b=None):
    kx, kc, kp = jax.random.split(key, 3)
    x = jax.random.normal(kx, (B, out_dim), jnp.float32)
    cell = jax.random.normal(kc, (B, F), jnp.float32)
    params = init_params(kp, F, out_dim)

    prepared = prepare_film_params(params, out_dim, matmul_dtype=matmul_dtype)
    film_out, cell_out = film_with_feature_forward(x, cell, prepared, block_b=block_b)
    jax.block_until_ready(film_out)
    jax.block_until_ready(cell_out)

    ref = reference_forward(x, cell, params)
    assert film_out.shape == (B, out_dim)
    assert jnp.allclose(film_out, ref, atol=atol, rtol=rtol), \
        f"mismatch vs reference (B={B}, F={F}, out_dim={out_dim}, dtype={matmul_dtype})"
    assert jnp.array_equal(cell_out, cell), "cell_line_features must pass through unchanged"


if __name__ == "__main__":
    key = jax.random.PRNGKey(0)
    k1, k2, k3 = jax.random.split(key, 3)

    # Case 1: module-native small shapes, f32 MXU path (bit-tight vs reference).
    _run_case(k1, B=8, F=32, out_dim=32, matmul_dtype=jnp.float32,
              atol=1e-5, rtol=1e-5)

    # Case 2: ragged batch + non-128 feature dims, default bf16 streaming/MXU
    # (f32 accumulate) — tolerance loosened accordingly.
    _run_case(k2, B=50, F=160, out_dim=96, matmul_dtype=jnp.bfloat16,
              atol=5e-2, rtol=5e-2)

    # Case 3: forced multi-step grid with a partial last row block (no wrapper
    # batch padding) — validates the write-masked ragged-tail path, f32.
    _run_case(k3, B=50, F=160, out_dim=96, matmul_dtype=jnp.float32,
              atol=1e-4, rtol=1e-4, block_b=32)

    print("KERNEL_OK")
</pallas_src>

<mosaic_0001>
module attributes {stable_mosaic.version = 11 : i64} {
  func.func @film_kernel(%arg0: i32, %arg1: memref<8x128xf32, #tpu.memory_space<vmem>>, %arg2: memref<8x128xf32, #tpu.memory_space<vmem>>, %arg3: memref<128x128xf32, #tpu.memory_space<vmem>>, %arg4: memref<1x128xf32, #tpu.memory_space<vmem>>, %arg5: memref<128x256xf32, #tpu.memory_space<vmem>>, %arg6: memref<1x256xf32, #tpu.memory_space<vmem>>, %arg7: memref<8x128xf32, #tpu.memory_space<vmem>>) attributes {dimension_semantics = [#tpu.dimension_semantics<parallel>], iteration_bounds = array<i64: 1>, scalar_prefetch = 0 : i64, scratch_operands = 0 : i64, tpu.core_type = #tpu.core_type<tc>, window_params = [{transform_indices = @transform_0, window_bounds = array<i64: 8, 128>}, {transform_indices = @transform_1, window_bounds = array<i64: 8, 128>}, {pipeline_mode = #tpu.pipeline_mode<synchronous>, transform_indices = @transform_2, window_bounds = array<i64: 128, 128>}, {pipeline_mode = #tpu.pipeline_mode<synchronous>, transform_indices = @transform_3, window_bounds = array<i64: 1, 128>}, {pipeline_mode = #tpu.pipeline_mode<synchronous>, transform_indices = @transform_4, window_bounds = array<i64: 128, 256>}, {pipeline_mode = #tpu.pipeline_mode<synchronous>, transform_indices = @transform_5, window_bounds = array<i64: 1, 256>}, {transform_indices = @transform_6, window_bounds = array<i64: 8, 128>}]} {
    %c0 = arith.constant 0 : index
    %c0_0 = arith.constant 0 : index
    %0 = vector.load %arg2[%c0, %c0_0] : memref<8x128xf32, #tpu.memory_space<vmem>>, vector<8x128xf32>
    %c0_1 = arith.constant 0 : index
    %c0_2 = arith.constant 0 : index
    %1 = vector.load %arg3[%c0_1, %c0_2] : memref<128x128xf32, #tpu.memory_space<vmem>>, vector<128x128xf32>
    %cst = arith.constant dense<0.000000e+00> : vector<8x128xf32>
    %2 = tpu.matmul %0, %1, %cst {dimension_numbers = #tpu.dot_dimension_numbers<[1], [0], [0], [1], [0, 0, 1, 1], [], []>} : vector<8x128xf32>, vector<128x128xf32>, vector<8x128xf32> -> vector<8x128xf32>
    %c0_3 = arith.constant 0 : index
    %c0_4 = arith.constant 0 : index
    %3 = vector.load %arg4[%c0_3, %c0_4] : memref<1x128xf32, #tpu.memory_space<vmem>>, vector<1x128xf32>
    %4 = vector.broadcast %3 : vector<1x128xf32> to vector<8x128xf32>
    %5 = arith.addf %2, %4 : vector<8x128xf32>
    %cst_5 = arith.constant 0.000000e+00 : f32
    %6 = vector.broadcast %cst_5 : f32 to vector<8x128xf32>
    %7 = arith.maximumf %5, %6 : vector<8x128xf32>
    %c0_6 = arith.constant 0 : index
    %c0_7 = arith.constant 0 : index
    %8 = vector.load %arg5[%c0_6, %c0_7] : memref<128x256xf32, #tpu.memory_space<vmem>>, vector<128x256xf32>
    %cst_8 = arith.constant dense<0.000000e+00> : vector<8x256xf32>
    %9 = tpu.matmul %7, %8, %cst_8 {dimension_numbers = #tpu.dot_dimension_numbers<[1], [0], [0], [1], [0, 0, 1, 1], [], []>} : vector<8x128xf32>, vector<128x256xf32>, vector<8x256xf32> -> vector<8x256xf32>
    %c0_9 = arith.constant 0 : index
    %c0_10 = arith.constant 0 : index
    %10 = vector.load %arg6[%c0_9, %c0_10] : memref<1x256xf32, #tpu.memory_space<vmem>>, vector<1x256xf32>
    %11 = vector.broadcast %10 : vector<1x256xf32> to vector<8x256xf32>
    %12 = arith.addf %9, %11 : vector<8x256xf32>
    %13 = vector.extract_strided_slice %12 {offsets = [0, 0], sizes = [8, 128], strides = [1, 1]} : vector<8x256xf32> to vector<8x128xf32>
    %c0_11 = arith.constant 0 : index
    %c0_12 = arith.constant 0 : index
    %14 = vector.load %arg1[%c0_11, %c0_12] : memref<8x128xf32, #tpu.memory_space<vmem>>, vector<8x128xf32>
    %15 = arith.mulf %13, %14 : vector<8x128xf32>
    %16 = vector.extract_strided_slice %12 {offsets = [0, 128], sizes = [8, 128], strides = [1, 1]} : vector<8x256xf32> to vector<8x128xf32>
    %17 = arith.addf %15, %16 : vector<8x128xf32>
    %c0_13 = arith.constant 0 : index
    %c0_14 = arith.constant 0 : index
    %18 = vector.load %arg7[%c0_13, %c0_14] : memref<8x128xf32, #tpu.memory_space<vmem>>, vector<8x128xf32>
    tpu.vector_store %arg7[%c0_13, %c0_14], %17 {strides = array<i32>} : memref<8x128xf32, #tpu.memory_space<vmem>>, vector<8x128xf32>,
    return
  }
  func.func @transform_0(%arg0: i32) -> (i32, i32) {
    %c0_i32 = arith.constant 0 : i32
    %c0_i32_0 = arith.constant 0 : i32
    return %arg0, %c0_i32 : i32, i32
  }
  func.func @transform_1(%arg0: i32) -> (i32, i32) {
    %c0_i32 = arith.constant 0 : i32
    %c0_i32_0 = arith.constant 0 : i32
    return %arg0, %c0_i32 : i32, i32
  }
  func.func @transform_2(%arg0: i32) -> (i32, i32) {
    %c0_i32 = arith.constant 0 : i32
    %c0_i32_0 = arith.constant 0 : i32
    %c0_i32_1 = arith.constant 0 : i32
    return %c0_i32, %c0_i32_0 : i32, i32
  }
  func.func @transform_3(%arg0: i32) -> (i32, i32) {
    %c0_i32 = arith.constant 0 : i32
    %c0_i32_0 = arith.constant 0 : i32
    %c0_i32_1 = arith.constant 0 : i32
    return %c0_i32, %c0_i32_0 : i32, i32
  }
  func.func @transform_4(%arg0: i32) -> (i32, i32) {
    %c0_i32 = arith.constant 0 : i32
    %c0_i32_0 = arith.constant 0 : i32
    %c0_i32_1 = arith.constant 0 : i32
    return %c0_i32, %c0_i32_0 : i32, i32
  }
  func.func @transform_5(%arg0: i32) -> (i32, i32) {
    %c0_i32 = arith.constant 0 : i32
    %c0_i32_0 = arith.constant 0 : i32
    %c0_i32_1 = arith.constant 0 : i32
    return %c0_i32, %c0_i32_0 : i32, i32
  }
  func.func @transform_6(%arg0: i32) -> (i32, i32) {
    %c0_i32 = arith.constant 0 : i32
    %c0_i32_0 = arith.constant 0 : i32
    return %arg0, %c0_i32 : i32, i32
  }
}

module attributes {stable_mosaic.version = 11 : i64} {
  func.func @film_kernel(%arg0: i32, %arg1: memref<8x128xf32, #tpu.memory_space<vmem>>, %arg2: memref<8x128xf32, #tpu.memory_space<vmem>>, %arg3: memref<128x128xf32, #tpu.memory_space<vmem>>, %arg4: memref<1x128xf32, #tpu.memory_space<vmem>>, %arg5: memref<128x256xf32, #tpu.memory_space<vmem>>, %arg6: memref<1x256xf32, #tpu.memory_space<vmem>>, %arg7: memref<8x128xf32, #tpu.memory_space<vmem>>) attributes {dimension_semantics = [#tpu.dimension_semantics<parallel>], iteration_bounds = array<i64: 1>, scalar_prefetch = 0 : i64, scratch_operands = 0 : i64, tpu.core_type = #tpu.core_type<tc>, window_params = [{transform_indices = @transform_0, window_bounds = array<i64: 8, 128>}, {transform_indices = @transform_1, window_bounds = array<i64: 8, 128>}, {pipeline_mode = #tpu.pipeline_mode<synchronous>, transform_indices = @transform_2, window_bounds = array<i64: 128, 128>}, {pipeline_mode = #tpu.pipeline_mode<synchronous>, transform_indices = @transform_3, window_bounds = array<i64: 1, 128>}, {pipeline_mode = #tpu.pipeline_mode<synchronous>, transform_indices = @transform_4, window_bounds = array<i64: 128, 256>}, {pipeline_mode = #tpu.pipeline_mode<synchronous>, transform_indices = @transform_5, window_bounds = array<i64: 1, 256>}, {transform_indices = @transform_6, window_bounds = array<i64: 8, 128>}]} {
    %c0 = arith.constant 0 : index
    %c0_0 = arith.constant 0 : index
    %0 = vector.load %arg2[%c0, %c0_0] : memref<8x128xf32, #tpu.memory_space<vmem>>, vector<8x128xf32>
    %c0_1 = arith.constant 0 : index
    %c0_2 = arith.constant 0 : index
    %1 = vector.load %arg3[%c0_1, %c0_2] : memref<128x128xf32, #tpu.memory_space<vmem>>, vector<128x128xf32>
    %cst = arith.constant dense<0.000000e+00> : vector<8x128xf32>
    %2 = tpu.matmul %0, %1, %cst {dimension_numbers = #tpu.dot_dimension_numbers<[1], [0], [0], [1], [0, 0, 1, 1], [], []>} : vector<8x128xf32>, vector<128x128xf32>, vector<8x128xf32> -> vector<8x128xf32>
    %c0_3 = arith.constant 0 : index
    %c0_4 = arith.constant 0 : index
    %3 = vector.load %arg4[%c0_3, %c0_4] : memref<1x128xf32, #tpu.memory_space<vmem>>, vector<1x128xf32>
    %4 = vector.broadcast %3 : vector<1x128xf32> to vector<8x128xf32>
    %5 = arith.addf %2, %4 : vector<8x128xf32>
    %cst_5 = arith.constant 0.000000e+00 : f32
    %6 = vector.broadcast %cst_5 : f32 to vector<8x128xf32>
    %7 = arith.maximumf %5, %6 : vector<8x128xf32>
    %c0_6 = arith.constant 0 : index
    %c0_7 = arith.constant 0 : index
    %8 = vector.load %arg5[%c0_6, %c0_7] : memref<128x256xf32, #tpu.memory_space<vmem>>, vector<128x256xf32>
    %cst_8 = arith.constant dense<0.000000e+00> : vector<8x256xf32>
    %9 = tpu.matmul %7, %8, %cst_8 {dimension_numbers = #tpu.dot_dimension_numbers<[1], [0], [0], [1], [0, 0, 1, 1], [], []>} : vector<8x128xf32>, vector<128x256xf32>, vector<8x256xf32> -> vector<8x256xf32>
    %c0_9 = arith.constant 0 : index
    %c0_10 = arith.constant 0 : index
    %10 = vector.load %arg6[%c0_9, %c0_10] : memref<1x256xf32, #tpu.memory_space<vmem>>, vector<1x256xf32>
    %11 = vector.broadcast %10 : vector<1x256xf32> to vector<8x256xf32>
    %12 = arith.addf %9, %11 : vector<8x256xf32>
    %13 = vector.extract_strided_slice %12 {offsets = [0, 0], sizes = [8, 128], strides = [1, 1]} : vector<8x256xf32> to vector<8x128xf32>
    %c0_11 = arith.constant 0 : index
    %c0_12 = arith.constant 0 : index
    %14 = vector.load %arg1[%c0_11, %c0_12] : memref<8x128xf32, #tpu.memory_space<vmem>>, vector<8x128xf32>
    %15 = arith.mulf %13, %14 : vector<8x128xf32>
    %16 = vector.extract_strided_slice %12 {offsets = [0, 128], sizes = [8, 128], strides = [1, 1]} : vector<8x256xf32> to vector<8x128xf32>
    %17 = arith.addf %15, %16 : vector<8x128xf32>
    %c0_13 = arith.constant 0 : index
    %c0_14 = arith.constant 0 : index
    %18 = vector.load %arg7[%c0_13, %c0_14] : memref<8x128xf32, #tpu.memory_space<vmem>>, vector<8x128xf32>
    tpu.vector_store %arg7[%c0_13, %c0_14], %17 {strides = array<i32>} : memref<8x128xf32, #tpu.memory_space<vmem>>, vector<8x128xf32>,
    return
  }
  func.func @transform_0(%arg0: i32) -> (i32, i32) {
    %c0_i32 = arith.constant 0 : i32
    %c0_i32_0 = arith.constant 0 : i32
    return %arg0, %c0_i32 : i32, i32
  }
  func.func @transform_1(%arg0: i32) -> (i32, i32) {
    %c0_i32 = arith.constant 0 : i32
    %c0_i32_0 = arith.constant 0 : i32
    return %arg0, %c0_i32 : i32, i32
  }
  func.func @transform_2(%arg0: i32) -> (i32, i32) {
    %c0_i32 = arith.constant 0 : i32
    %c0_i32_0 = arith.constant 0 : i32
    %c0_i32_1 = arith.constant 0 : i32
    return %c0_i32, %c0_i32_0 : i32, i32
  }
  func.func @transform_3(%arg0: i32) -> (i32, i32) {
    %c0_i32 = arith.constant 0 : i32
    %c0_i32_0 = arith.constant 0 : i32
    %c0_i32_1 = arith.constant 0 : i32
    return %c0_i32, %c0_i32_0 : i32, i32
  }
  func.func @transform_4(%arg0: i32) -> (i32, i32) {
    %c0_i32 = arith.constant 0 : i32
    %c0_i32_0 = arith.constant 0 : i32
    %c0_i32_1 = arith.constant 0 : i32
    return %c0_i32, %c0_i32_0 : i32, i32
  }
  func.func @transform_5(%arg0: i32) -> (i32, i32) {
    %c0_i32 = arith.constant 0 : i32
    %c0_i32_0 = arith.constant 0 : i32
    %c0_i32_1 = arith.constant 0 : i32
    return %c0_i32, %c0_i32_0 : i32, i32
  }
  func.func @transform_6(%arg0: i32) -> (i32, i32) {
    %c0_i32 = arith.constant 0 : i32
    %c0_i32_0 = arith.constant 0 : i32
    return %arg0, %c0_i32 : i32, i32
  }
}

</mosaic_0001>

<llo_original>
// kernel: tpu_custom_call.1
$region0: #{tpu_custom_call.1}
  #allocation0 [shape = 'u32[]', space=smem, size = 0x4, offset = 0x4, fixed_abs, tag = 'smem constant byte address 0x4 - core index']
  #allocation1 [shape = 'u32[144,128]{1,0:T(1,128)}', space=vmem, size = 0x12000, scoped, tag = 'internal scratch']
  %s0 = inlined_call_operand.hbm [shape: f32[8,128], index: 0, kind: input, shape index: {}]
  %s1 = inlined_call_operand.hbm [shape: f32[8,128], index: 1, kind: input, shape index: {}]
  %s2 = inlined_call_operand.hbm [shape: f32[128,128], index: 2, kind: input, shape index: {}]
  %s3 = inlined_call_operand.vmem [shape: f32[1,128], index: 3, kind: input, shape index: {}]
  %s4 = inlined_call_operand.hbm [shape: f32[128,256], index: 4, kind: input, shape index: {}]
  %s5 = inlined_call_operand.vmem [shape: f32[1,256], index: 5, kind: input, shape index: {}]
  %s6 = inlined_call_operand.hbm [shape: f32[8,128], index: 6, kind: output, shape index: {}]
  %s7 = sld [smem:[#allocation0]]
  $region50: #{tpu_custom_call.1} parent=0
    _
  %s9 = ssub.s32 1, %s7
  %s10 = scalar_select 0, %s9, %s7
  $region1: #{tpu_custom_call.1} parent=0
    #allocation2 [shape = 'u8[4096]{0}', space=vmem, size = 0x1000, scoped, tag = 'input window, operand 0, single buffered']
    #allocation3 [shape = 's32[1]{0}', space=sflag, size = 0x4, scoped, tag = 'scoped memory for tpu_custom_call.1']
    #allocation4 [shape = 's32[1]{0}', space=sflag, size = 0x4, scoped, tag = 'scoped memory for tpu_custom_call.1']
    #allocation5 [shape = 'u8[4096]{0}', space=vmem, size = 0x1000, scoped, tag = 'input window, operand 1, single buffered']
    #allocation6 [shape = 's32[1]{0}', space=sflag, size = 0x4, scoped, tag = 'scoped memory for tpu_custom_call.1']
    #allocation7 [shape = 'u8[65536]{0}', space=vmem, size = 0x10000, scoped, tag = 'input window, operand 2, single buffered']
    #allocation8 [shape = 'u8[131072]{0}', space=vmem, size = 0x20000, scoped, tag = 'input window, operand 4, single buffered']
    #allocation9 [shape = 's32[1]{0}', space=sflag, size = 0x4, scoped, tag = 'scoped memory for tpu_custom_call.1']
    #allocation10 [shape = 'u8[4096]{0}', space=vmem, size = 0x1000, scoped, tag = 'output window, operand 0, single buffered']
    %11 = vsyncpa [#allocation3], 0
    %12 = vsyncpa [#allocation6], 0
    %13 = vsyncpa [#allocation9], 0
    %14 = vsyncpa [#allocation4], 0
    // Predicated region
    $region2: #{tpu_custom_call.1} parent=1 // pred_check
      _
    $region3: #{tpu_custom_call.1} parent=1 // pred_check_branch
      %16 = sbr.rel (0) target = $region5
    $region4: #{tpu_custom_call.1} parent=1 // pred_region
      %s18 = ssub.s32 128, 128
      %19 = vsyncadd [#allocation3], %s18
      %s21 = sshll.u32 [#allocation2], 4
      %s22 = int_to_ptr.vmem [resolvable:$true] %s21
      %24 = dma.hbm_to_vmem [thread:$0]  %s0, 128, %s22, [#allocation3]
    $region5: #{tpu_custom_call.1} parent=1 // pred_fallthru
      _
    // Predicated region
    $region6: #{tpu_custom_call.1} parent=1 // pred_check
      _
    $region7: #{tpu_custom_call.1} parent=1 // pred_check_branch
      %26 = sbr.rel (0) target = $region9
    $region8: #{tpu_custom_call.1} parent=1 // pred_region
      %s28 = ssub.s32 128, 128
      %29 = vsyncadd [#allocation6], %s28
      %s31 = sshll.u32 [#allocation5], 4
      %s32 = int_to_ptr.vmem [resolvable:$true] %s31
      %34 = dma.hbm_to_vmem [thread:$0]  %s1, 128, %s32, [#allocation6]
    $region9: #{tpu_custom_call.1} parent=1 // pred_fallthru
      _
    // Predicated region
    $region10: #{tpu_custom_call.1} parent=1 // pred_check
      _
    $region11: #{tpu_custom_call.1} parent=1 // pred_check_branch
      %36 = sbr.rel (0) target = $region13
    $region12: #{tpu_custom_call.1} parent=1 // pred_region
      %s38 = ssub.s32 2048, 2048
      %39 = vsyncadd [#allocation6], %s38
      %s40 = sshll.u32 [#allocation7], 4
      %s41 = int_to_ptr.vmem [resolvable:$true] %s40
      %46 = dma.hbm_to_vmem [thread:$0]  %s2, 2048, %s41, [#allocation6], 128, 128, 8
    $region13: #{tpu_custom_call.1} parent=1 // pred_fallthru
      _
    // Predicated region
    $region14: #{tpu_custom_call.1} parent=1 // pred_check
      _
    $region15: #{tpu_custom_call.1} parent=1 // pred_check_branch
      %48 = sbr.rel (0) target = $region17
    $region16: #{tpu_custom_call.1} parent=1 // pred_region
      _
    $region17: #{tpu_custom_call.1} parent=1 // pred_fallthru
      _
    // Predicated region
    $region18: #{tpu_custom_call.1} parent=1 // pred_check
      _
    $region19: #{tpu_custom_call.1} parent=1 // pred_check_branch
      %50 = sbr.rel (0) target = $region21
    $region20: #{tpu_custom_call.1} parent=1 // pred_region
      %s52 = ssub.s32 4096, 4096
      %53 = vsyncadd [#allocation9], %s52
      %s54 = sshll.u32 [#allocation8], 4
      %s55 = int_to_ptr.vmem [resolvable:$true] %s54
      %60 = dma.hbm_to_vmem [thread:$0]  %s4, 4096, %s55, [#allocation9], 256, 256, 16
    $region21: #{tpu_custom_call.1} parent=1 // pred_fallthru
      _
    // Predicated region
    $region22: #{tpu_custom_call.1} parent=1 // pred_check
      _
    $region23: #{tpu_custom_call.1} parent=1 // pred_check_branch
      %62 = sbr.rel (0) target = $region25
    $region24: #{tpu_custom_call.1} parent=1 // pred_region
      _
    $region25: #{tpu_custom_call.1} parent=1 // pred_fallthru
      _
    // Predicated region
    $region26: #{tpu_custom_call.1} parent=1 // pred_check
      _
    $region27: #{tpu_custom_call.1} parent=1 // pred_check_branch
      %64 = sbr.rel (0) target = $region29
    $region28: #{tpu_custom_call.1} parent=1 // pred_region
      %65 = dma.done [#allocation3], 128
    $region29: #{tpu_custom_call.1} parent=1 // pred_fallthru
      _
    // Predicated region
    $region30: #{tpu_custom_call.1} parent=1 // pred_check
      _
    $region31: #{tpu_custom_call.1} parent=1 // pred_check_branch
      %67 = sbr.rel (0) target = $region33
    $region32: #{tpu_custom_call.1} parent=1 // pred_region
      %68 = dma.done [#allocation6], 128
    $region33: #{tpu_custom_call.1} parent=1 // pred_fallthru
      _
    // Predicated region
    $region34: #{tpu_custom_call.1} parent=1 // pred_check
      _
    $region35: #{tpu_custom_call.1} parent=1 // pred_check_branch
      %70 = sbr.rel (0) target = $region37
    $region36: #{tpu_custom_call.1} parent=1 // pred_region
      %71 = dma.done [#allocation6], 2048
    $region37: #{tpu_custom_call.1} parent=1 // pred_fallthru
      _
    // Predicated region
    $region38: #{tpu_custom_call.1} parent=1 // pred_check
      _
    $region39: #{tpu_custom_call.1} parent=1 // pred_check_branch
      %73 = sbr.rel (0) target = $region41
    $region40: #{tpu_custom_call.1} parent=1 // pred_region
      %74 = dma.done [#allocation9], 4096
    $region41: #{tpu_custom_call.1} parent=1 // pred_fallthru
      _
    %v75 = vld [vmem:[#allocation5] sm:$0xff]
    %v76 = vld [vmem:[#allocation7] sm:$0xff]
    %v77 = vld [vmem:[#allocation7 + $0x8] sm:$0xff]
    %v78 = vld [vmem:[#allocation7 + $0x10] sm:$0xff]
    %v79 = vld [vmem:[#allocation7 + $0x18] sm:$0xff]
    %v80 = vld [vmem:[#allocation7 + $0x20] sm:$0xff]
    %v81 = vld [vmem:[#allocation7 + $0x28] sm:$0xff]
    %v82 = vld [vmem:[#allocation7 + $0x30] sm:$0xff]
    %v83 = vld [vmem:[#allocation7 + $0x38] sm:$0xff]
    %v84 = vld [vmem:[#allocation7 + $0x40] sm:$0xff]
    %v85 = vld [vmem:[#allocation7 + $0x48] sm:$0xff]
    %v86 = vld [vmem:[#allocation7 + $0x50] sm:$0xff]
    %v87 = vld [vmem:[#allocation7 + $0x58] sm:$0xff]
    %v88 = vld [vmem:[#allocation7 + $0x60] sm:$0xff]
    %v89 = vld [vmem:[#allocation7 + $0x68] sm:$0xff]
    %v90 = vld [vmem:[#allocation7 + $0x70] sm:$0xff]
    %v91 = vld [vmem:[#allocation7 + $0x78] sm:$0xff]
    %v92 = vld [vmem:[%s3] sm:$0x1]
    %v94 = vlaneseq
    %v95 = vshrl.u32 %v94, 7
    %v96 = vsub.s32 0, %v95
    %v97 = vrot.slane %v92, %v96
    %99 = vmatprep.subr.mxu0 0.0
    %100 = vmatpush1.msra.mxu0 %v76
    %101 = vmatprep.subr.mxu0 0.0
    %102 = vmatpush1.msra.mxu0 %v77
    %103 = vmatprep.subr.mxu0 0.0
    %104 = vmatpush1.msra.mxu0 %v78
    %105 = vmatprep.subr.mxu0 0.0
    %106 = vmatpush1.msra.mxu0 %v79
    %107 = vmatprep.subr.mxu0 0.0
    %108 = vmatpush1.msra.mxu0 %v80
    %109 = vmatprep.subr.mxu0 0.0
    %110 = vmatpush1.msra.mxu0 %v81
    %111 = vmatprep.subr.mxu0 0.0
    %112 = vmatpush1.msra.mxu0 %v82
    %113 = vmatprep.subr.mxu0 0.0
    %114 = vmatpush1.msra.mxu0 %v83
    %115 = vmatprep.subr.mxu0 0.0
    %116 = vmatpush1.msra.mxu0 %v84
    %117 = vmatprep.subr.mxu0 0.0
    %118 = vmatpush1.msra.mxu0 %v85
    %119 = vmatprep.subr.mxu0 0.0
    %120 = vmatpush1.msra.mxu0 %v86
    %121 = vmatprep.subr.mxu0 0.0
    %122 = vmatpush1.msra.mxu0 %v87
    %123 = vmatprep.subr.mxu0 0.0
    %124 = vmatpush1.msra.mxu0 %v88
    %125 = vmatprep.subr.mxu0 0.0
    %126 = vmatpush1.msra.mxu0 %v89
    %127 = vmatprep.subr.mxu0 0.0
    %128 = vmatpush1.msra.mxu0 %v90
    %129 = vmatprep.subr.mxu0 0.0
    %130 = vmatpush1.msra.mxu0 %v91
    %131 = vmatprep.subr.mxu0 0.0
    %132 = vmatpush1.msra.mxu0 0.0
    %133 = vmatprep.subr.mxu0 0.0
    %134 = vmatpush1.msra.mxu0 0.0
    %135 = vmatprep.subr.mxu0 0.0
    %136 = vmatpush1.msra.mxu0 0.0
    %137 = vmatprep.subr.mxu0 0.0
    %138 = vmatpush1.msra.mxu0 0.0
    %139 = vmatprep.subr.mxu0 0.0
    %140 = vmatpush1.msra.mxu0 0.0
    %141 = vmatprep.subr.mxu0 0.0
    %142 = vmatpush1.msra.mxu0 0.0
    %143 = vmatprep.subr.mxu0 0.0
    %144 = vmatpush1.msra.mxu0 0.0
    %145 = vmatprep.subr.mxu0 0.0
    %146 = vmatpush1.msra.mxu0 0.0
    %147 = vmatprep.subr.mxu0 0.0
    %148 = vmatpush1.msra.mxu0 0.0
    %149 = vmatprep.subr.mxu0 0.0
    %150 = vmatpush1.msra.mxu0 0.0
    %151 = vmatprep.subr.mxu0 0.0
    %152 = vmatpush1.msra.mxu0 0.0
    %153 = vmatprep.subr.mxu0 0.0
    %154 = vmatpush1.msra.mxu0 0.0
    %155 = vmatprep.subr.mxu0 0.0
    %156 = vmatpush1.msra.mxu0 0.0
    %157 = vmatprep.subr.mxu0 0.0
    %158 = vmatpush1.msra.mxu0 0.0
    %159 = vmatprep.subr.mxu0 0.0
    %160 = vmatpush1.msra.mxu0 0.0
    %161 = vmatprep.subr.mxu0 0.0
    %162 = vmatpush1.msra.mxu0 0.0
    %163 = vmatprep.mubr.f32.mxu0 0.0
    %164 = vmatmul.mubr.f32.gmra.mrb[0].mxu0 %v75
    %v165 = vpop.f32.mrb[0].mxu0
    %v166 = vadd.f32 %v97, %v165
    %v167 = vpop.f32.mrb[0].mxu0
    %168 = vdwg.mxu0
    %v169 = vmax.f32 %v166, 0.0
    %v170 = vld [vmem:[#allocation8] sm:$0xff]
    %v171 = vld [vmem:[#allocation8 + $0x8] sm:$0xff]
    %v172 = vld [vmem:[#allocation8 + $0x10] sm:$0xff]
    %v173 = vld [vmem:[#allocation8 + $0x18] sm:$0xff]
    %v174 = vld [vmem:[#allocation8 + $0x20] sm:$0xff]
    %v175 = vld [vmem:[#allocation8 + $0x28] sm:$0xff]
    %v176 = vld [vmem:[#allocation8 + $0x30] sm:$0xff]
    %v177 = vld [vmem:[#allocation8 + $0x38] sm:$0xff]
    %v178 = vld [vmem:[#allocation8 + $0x40] sm:$0xff]
    %v179 = vld [vmem:[#allocation8 + $0x48] sm:$0xff]
    %v180 = vld [vmem:[#allocation8 + $0x50] sm:$0xff]
    %v181 = vld [vmem:[#allocation8 + $0x58] sm:$0xff]
    %v182 = vld [vmem:[#allocation8 + $0x60] sm:$0xff]
    %v183 = vld [vmem:[#allocation8 + $0x68] sm:$0xff]
    %v184 = vld [vmem:[#allocation8 + $0x70] sm:$0xff]
    %v185 = vld [vmem:[#allocation8 + $0x78] sm:$0xff]
    %v186 = vld [vmem:[#allocation8 + $0x80] sm:$0xff]
    %v187 = vld [vmem:[#allocation8 + $0x88] sm:$0xff]
    %v188 = vld [vmem:[#allocation8 + $0x90] sm:$0xff]
    %v189 = vld [vmem:[#allocation8 + $0x98] sm:$0xff]
    %v190 = vld [vmem:[#allocation8 + $0xa0] sm:$0xff]
    %v191 = vld [vmem:[#allocation8 + $0xa8] sm:$0xff]
    %v192 = vld [vmem:[#allocation8 + $0xb0] sm:$0xff]
    %v193 = vld [vmem:[#allocation8 + $0xb8] sm:$0xff]
    %v194 = vld [vmem:[#allocation8 + $0xc0] sm:$0xff]
    %v195 = vld [vmem:[#allocation8 + $0xc8] sm:$0xff]
    %v196 = vld [vmem:[#allocation8 + $0xd0] sm:$0xff]
    %v197 = vld [vmem:[#allocation8 + $0xd8] sm:$0xff]
    %v198 = vld [vmem:[#allocation8 + $0xe0] sm:$0xff]
    %v199 = vld [vmem:[#allocation8 + $0xe8] sm:$0xff]
    %v200 = vld [vmem:[#allocation8 + $0xf0] sm:$0xff]
    %v201 = vld [vmem:[#allocation8 + $0xf8] sm:$0xff]
    %v202 = vld [vmem:[%s5] sm:$0x3]
    %v204 = vlaneseq
    %v205 = vshrl.u32 %v204, 7
    %v206 = vsub.s32 0, %v205
    %v207 = vrot.slane %v202, %v206
    %v208 = vlaneseq
    %v209 = vshrl.u32 %v208, 7
    %v210 = vsub.s32 1, %v209
    %v211 = vrot.slane %v202, %v210
    %214 = vmatprep.subr.mxu0 %v171
    %215 = vmatpush1.msra.mxu0 %v170
    %216 = vmatprep.subr.mxu0 %v173
    %217 = vmatpush1.msra.mxu0 %v172
    %218 = vmatprep.subr.mxu0 %v175
    %219 = vmatpush1.msra.mxu0 %v174
    %220 = vmatprep.subr.mxu0 %v177
    %221 = vmatpush1.msra.mxu0 %v176
    %222 = vmatprep.subr.mxu0 %v179
    %223 = vmatpush1.msra.mxu0 %v178
    %224 = vmatprep.subr.mxu0 %v181
    %225 = vmatpush1.msra.mxu0 %v180
    %226 = vmatprep.subr.mxu0 %v183
    %227 = vmatpush1.msra.mxu0 %v182
    %228 = vmatprep.subr.mxu0 %v185
    %229 = vmatpush1.msra.mxu0 %v184
    %230 = vmatprep.subr.mxu0 %v187
    %231 = vmatpush1.msra.mxu0 %v186
    %232 = vmatprep.subr.mxu0 %v189
    %233 = vmatpush1.msra.mxu0 %v188
    %234 = vmatprep.subr.mxu0 %v191
    %235 = vmatpush1.msra.mxu0 %v190
    %236 = vmatprep.subr.mxu0 %v193
    %237 = vmatpush1.msra.mxu0 %v192
    %238 = vmatprep.subr.mxu0 %v195
    %239 = vmatpush1.msra.mxu0 %v194
    %240 = vmatprep.subr.mxu0 %v197
    %241 = vmatpush1.msra.mxu0 %v196
    %242 = vmatprep.subr.mxu0 %v199
    %243 = vmatpush1.msra.mxu0 %v198
    %244 = vmatprep.subr.mxu0 %v201
    %245 = vmatpush1.msra.mxu0 %v200
    %246 = vmatprep.subr.mxu0 0.0
    %247 = vmatpush1.msra.mxu0 0.0
    %248 = vmatprep.subr.mxu0 0.0
    %249 = vmatpush1.msra.mxu0 0.0
    %250 = vmatprep.subr.mxu0 0.0
    %251 = vmatpush1.msra.mxu0 0.0
    %252 = vmatprep.subr.mxu0 0.0
    %253 = vmatpush1.msra.mxu0 0.0
    %254 = vmatprep.subr.mxu0 0.0
    %255 = vmatpush1.msra.mxu0 0.0
    %256 = vmatprep.subr.mxu0 0.0
    %257 = vmatpush1.msra.mxu0 0.0
    %258 = vmatprep.subr.mxu0 0.0
    %259 = vmatpush1.msra.mxu0 0.0
    %260 = vmatprep.subr.mxu0 0.0
    %261 = vmatpush1.msra.mxu0 0.0
    %262 = vmatprep.subr.mxu0 0.0
    %263 = vmatpush1.msra.mxu0 0.0
    %264 = vmatprep.subr.mxu0 0.0
    %265 = vmatpush1.msra.mxu0 0.0
    %266 = vmatprep.subr.mxu0 0.0
    %267 = vmatpush1.msra.mxu0 0.0
    %268 = vmatprep.subr.mxu0 0.0
    %269 = vmatpush1.msra.mxu0 0.0
    %270 = vmatprep.subr.mxu0 0.0
    %271 = vmatpush1.msra.mxu0 0.0
    %272 = vmatprep.subr.mxu0 0.0
    %273 = vmatpush1.msra.mxu0 0.0
    %274 = vmatprep.subr.mxu0 0.0
    %275 = vmatpush1.msra.mxu0 0.0
    %276 = vmatprep.subr.mxu0 0.0
    %277 = vmatpush1.msra.mxu0 0.0
    %278 = vmatprep.mubr.f32.mxu0 0.0
    %279 = vmatmul.mubr.f32.gmra.mrb[0].mxu0 %v169
    %v280 = vpop.f32.mrb[0].mxu0
    %v281 = vadd.f32 %v207, %v280
    %v282 = vpop.f32.mrb[0].mxu0
    %v283 = vadd.f32 %v211, %v282
    %284 = vdwg.mxu0
    %v285 = vld [vmem:[#allocation2] sm:$0xff]
    %v286 = vmul.f32 %v281, %v285
    %v287 = vadd.f32 %v286, %v283
    %288 = vst [vmem:[#allocation10] sm:$0xff] %v287
    // Predicated region
    $region42: #{tpu_custom_call.1} parent=1 // pred_check
      _
    $region43: #{tpu_custom_call.1} parent=1 // pred_check_branch
      %290 = sbr.rel (0) target = $region45
    $region44: #{tpu_custom_call.1} parent=1 // pred_region
      %s292 = ssub.s32 128, 128
      %293 = vsyncadd [#allocation4], %s292
      %s295 = sshll.u32 [#allocation10], 4
      %s296 = int_to_ptr.vmem [resolvable:$true] %s295
      %298 = dma.vmem_to_hbm [thread:$0]  %s296, 128, %s6, [#allocation4]
    $region45: #{tpu_custom_call.1} parent=1 // pred_fallthru
      _
    // Predicated region
    $region46: #{tpu_custom_call.1} parent=1 // pred_check
      _
    $region47: #{tpu_custom_call.1} parent=1 // pred_check_branch
      %300 = sbr.rel (0) target = $region49
    $region48: #{tpu_custom_call.1} parent=1 // pred_region
      %301 = dma.done [#allocation4], 128
    $region49: #{tpu_custom_call.1} parent=1 // pred_fallthru
      _
    %302 = vsyncpa [#allocation3], 1
    %303 = vsyncpa [#allocation6], 1
    %304 = vsyncpa [#allocation9], 1
    %305 = vsyncpa [#allocation4], 1

// kernel: tpu_custom_call.1
$region0: #{tpu_custom_call.1}
  #allocation0 [shape = 'u32[]', space=smem, size = 0x4, offset = 0x4, fixed_abs, tag = 'smem constant byte address 0x4 - core index']
  #allocation1 [shape = 'u32[144,128]{1,0:T(1,128)}', space=vmem, size = 0x12000, scoped, tag = 'internal scratch']
  %s0 = inlined_call_operand.hbm [shape: f32[8,128], index: 0, kind: input, shape index: {}]
  %s1 = inlined_call_operand.hbm [shape: f32[8,128], index: 1, kind: input, shape index: {}]
  %s2 = inlined_call_operand.hbm [shape: f32[128,128], index: 2, kind: input, shape index: {}]
  %s3 = inlined_call_operand.vmem [shape: f32[1,128], index: 3, kind: input, shape index: {}]
  %s4 = inlined_call_operand.hbm [shape: f32[128,256], index: 4, kind: input, shape index: {}]
  %s5 = inlined_call_operand.vmem [shape: f32[1,256], index: 5, kind: input, shape index: {}]
  %s6 = inlined_call_operand.hbm [shape: f32[8,128], index: 6, kind: output, shape index: {}]
  %s7 = sld [smem:[#allocation0]]
  $region50: #{tpu_custom_call.1} parent=0
    _
  %s9 = ssub.s32 1, %s7
  %s10 = scalar_select 0, %s9, %s7
  $region1: #{tpu_custom_call.1} parent=0
    #allocation2 [shape = 'u8[4096]{0}', space=vmem, size = 0x1000, scoped, tag = 'input window, operand 0, single buffered']
    #allocation3 [shape = 's32[1]{0}', space=sflag, size = 0x4, scoped, tag = 'scoped memory for tpu_custom_call.1']
    #allocation4 [shape = 's32[1]{0}', space=sflag, size = 0x4, scoped, tag = 'scoped memory for tpu_custom_call.1']
    #allocation5 [shape = 'u8[4096]{0}', space=vmem, size = 0x1000, scoped, tag = 'input window, operand 1, single buffered']
    #allocation6 [shape = 's32[1]{0}', space=sflag, size = 0x4, scoped, tag = 'scoped memory for tpu_custom_call.1']
    #allocation7 [shape = 'u8[65536]{0}', space=vmem, size = 0x10000, scoped, tag = 'input window, operand 2, single buffered']
    #allocation8 [shape = 'u8[131072]{0}', space=vmem, size = 0x20000, scoped, tag = 'input window, operand 4, single buffered']
    #allocation9 [shape = 's32[1]{0}', space=sflag, size = 0x4, scoped, tag = 'scoped memory for tpu_custom_call.1']
    #allocation10 [shape = 'u8[4096]{0}', space=vmem, size = 0x1000, scoped, tag = 'output window, operand 0, single buffered']
    %11 = vsyncpa [#allocation3], 0
    %12 = vsyncpa [#allocation6], 0
    %13 = vsyncpa [#allocation9], 0
    %14 = vsyncpa [#allocation4], 0
    // Predicated region
    $region2: #{tpu_custom_call.1} parent=1 // pred_check
      _
    $region3: #{tpu_custom_call.1} parent=1 // pred_check_branch
      %16 = sbr.rel (0) target = $region5
    $region4: #{tpu_custom_call.1} parent=1 // pred_region
      %s18 = ssub.s32 128, 128
      %19 = vsyncadd [#allocation3], %s18
      %s21 = sshll.u32 [#allocation2], 4
      %s22 = int_to_ptr.vmem [resolvable:$true] %s21
      %24 = dma.hbm_to_vmem [thread:$0]  %s0, 128, %s22, [#allocation3]
    $region5: #{tpu_custom_call.1} parent=1 // pred_fallthru
      _
    // Predicated region
    $region6: #{tpu_custom_call.1} parent=1 // pred_check
      _
    $region7: #{tpu_custom_call.1} parent=1 // pred_check_branch
      %26 = sbr.rel (0) target = $region9
    $region8: #{tpu_custom_call.1} parent=1 // pred_region
      %s28 = ssub.s32 128, 128
      %29 = vsyncadd [#allocation6], %s28
      %s31 = sshll.u32 [#allocation5], 4
      %s32 = int_to_ptr.vmem [resolvable:$true] %s31
      %34 = dma.hbm_to_vmem [thread:$0]  %s1, 128, %s32, [#allocation6]
    $region9: #{tpu_custom_call.1} parent=1 // pred_fallthru
      _
    // Predicated region
    $region10: #{tpu_custom_call.1} parent=1 // pred_check
      _
    $region11: #{tpu_custom_call.1} parent=1 // pred_check_branch
      %36 = sbr.rel (0) target = $region13
    $region12: #{tpu_custom_call.1} parent=1 // pred_region
      %s38 = ssub.s32 2048, 2048
      %39 = vsyncadd [#allocation6], %s38
      %s40 = sshll.u32 [#allocation7], 4
      %s41 = int_to_ptr.vmem [resolvable:$true] %s40
      %46 = dma.hbm_to_vmem [thread:$0]  %s2, 2048, %s41, [#allocation6], 128, 128, 8
    $region13: #{tpu_custom_call.1} parent=1 // pred_fallthru
      _
    // Predicated region
    $region14: #{tpu_custom_call.1} parent=1 // pred_check
      _
    $region15: #{tpu_custom_call.1} parent=1 // pred_check_branch
      %48 = sbr.rel (0) target = $region17
    $region16: #{tpu_custom_call.1} parent=1 // pred_region
      _
    $region17: #{tpu_custom_call.1} parent=1 // pred_fallthru
      _
    // Predicated region
    $region18: #{tpu_custom_call.1} parent=1 // pred_check
      _
    $region19: #{tpu_custom_call.1} parent=1 // pred_check_branch
      %50 = sbr.rel (0) target = $region21
    $region20: #{tpu_custom_call.1} parent=1 // pred_region
      %s52 = ssub.s32 4096, 4096
      %53 = vsyncadd [#allocation9], %s52
      %s54 = sshll.u32 [#allocation8], 4
      %s55 = int_to_ptr.vmem [resolvable:$true] %s54
      %60 = dma.hbm_to_vmem [thread:$0]  %s4, 4096, %s55, [#allocation9], 256, 256, 16
    $region21: #{tpu_custom_call.1} parent=1 // pred_fallthru
      _
    // Predicated region
    $region22: #{tpu_custom_call.1} parent=1 // pred_check
      _
    $region23: #{tpu_custom_call.1} parent=1 // pred_check_branch
      %62 = sbr.rel (0) target = $region25
    $region24: #{tpu_custom_call.1} parent=1 // pred_region
      _
    $region25: #{tpu_custom_call.1} parent=1 // pred_fallthru
      _
    // Predicated region
    $region26: #{tpu_custom_call.1} parent=1 // pred_check
      _
    $region27: #{tpu_custom_call.1} parent=1 // pred_check_branch
      %64 = sbr.rel (0) target = $region29
    $region28: #{tpu_custom_call.1} parent=1 // pred_region
      %65 = dma.done [#allocation3], 128
    $region29: #{tpu_custom_call.1} parent=1 // pred_fallthru
      _
    // Predicated region
    $region30: #{tpu_custom_call.1} parent=1 // pred_check
      _
    $region31: #{tpu_custom_call.1} parent=1 // pred_check_branch
      %67 = sbr.rel (0) target = $region33
    $region32: #{tpu_custom_call.1} parent=1 // pred_region
      %68 = dma.done [#allocation6], 128
    $region33: #{tpu_custom_call.1} parent=1 // pred_fallthru
      _
    // Predicated region
    $region34: #{tpu_custom_call.1} parent=1 // pred_check
      _
    $region35: #{tpu_custom_call.1} parent=1 // pred_check_branch
      %70 = sbr.rel (0) target = $region37
    $region36: #{tpu_custom_call.1} parent=1 // pred_region
      %71 = dma.done [#allocation6], 2048
    $region37: #{tpu_custom_call.1} parent=1 // pred_fallthru
      _
    // Predicated region
    $region38: #{tpu_custom_call.1} parent=1 // pred_check
      _
    $region39: #{tpu_custom_call.1} parent=1 // pred_check_branch
      %73 = sbr.rel (0) target = $region41
    $region40: #{tpu_custom_call.1} parent=1 // pred_region
      %74 = dma.done [#allocation9], 4096
    $region41: #{tpu_custom_call.1} parent=1 // pred_fallthru
      _
    %v75 = vld [vmem:[#allocation5] sm:$0xff]
    %v76 = vld [vmem:[#allocation7] sm:$0xff]
    %v77 = vld [vmem:[#allocation7 + $0x8] sm:$0xff]
    %v78 = vld [vmem:[#allocation7 + $0x10] sm:$0xff]
    %v79 = vld [vmem:[#allocation7 + $0x18] sm:$0xff]
    %v80 = vld [vmem:[#allocation7 + $0x20] sm:$0xff]
    %v81 = vld [vmem:[#allocation7 + $0x28] sm:$0xff]
    %v82 = vld [vmem:[#allocation7 + $0x30] sm:$0xff]
    %v83 = vld [vmem:[#allocation7 + $0x38] sm:$0xff]
    %v84 = vld [vmem:[#allocation7 + $0x40] sm:$0xff]
    %v85 = vld [vmem:[#allocation7 + $0x48] sm:$0xff]
    %v86 = vld [vmem:[#allocation7 + $0x50] sm:$0xff]
    %v87 = vld [vmem:[#allocation7 + $0x58] sm:$0xff]
    %v88 = vld [vmem:[#allocation7 + $0x60] sm:$0xff]
    %v89 = vld [vmem:[#allocation7 + $0x68] sm:$0xff]
    %v90 = vld [vmem:[#allocation7 + $0x70] sm:$0xff]
    %v91 = vld [vmem:[#allocation7 + $0x78] sm:$0xff]
    %v92 = vld [vmem:[%s3] sm:$0x1]
    %v94 = vlaneseq
    %v95 = vshrl.u32 %v94, 7
    %v96 = vsub.s32 0, %v95
    %v97 = vrot.slane %v92, %v96
    %99 = vmatprep.subr.mxu0 0.0
    %100 = vmatpush1.msra.mxu0 %v76
    %101 = vmatprep.subr.mxu0 0.0
    %102 = vmatpush1.msra.mxu0 %v77
    %103 = vmatprep.subr.mxu0 0.0
    %104 = vmatpush1.msra.mxu0 %v78
    %105 = vmatprep.subr.mxu0 0.0
    %106 = vmatpush1.msra.mxu0 %v79
    %107 = vmatprep.subr.mxu0 0.0
    %108 = vmatpush1.msra.mxu0 %v80
    %109 = vmatprep.subr.mxu0 0.0
    %110 = vmatpush1.msra.mxu0 %v81
    %111 = vmatprep.subr.mxu0 0.0
    %112 = vmatpush1.msra.mxu0 %v82
    %113 = vmatprep.subr.mxu0 0.0
    %114 = vmatpush1.msra.mxu0 %v83
    %115 = vmatprep.subr.mxu0 0.0
    %116 = vmatpush1.msra.mxu0 %v84
    %117 = vmatprep.subr.mxu0 0.0
    %118 = vmatpush1.msra.mxu0 %v85
    %119 = vmatprep.subr.mxu0 0.0
    %120 = vmatpush1.msra.mxu0 %v86
    %121 = vmatprep.subr.mxu0 0.0
    %122 = vmatpush1.msra.mxu0 %v87
    %123 = vmatprep.subr.mxu0 0.0
    %124 = vmatpush1.msra.mxu0 %v88
    %125 = vmatprep.subr.mxu0 0.0
    %126 = vmatpush1.msra.mxu0 %v89
    %127 = vmatprep.subr.mxu0 0.0
    %128 = vmatpush1.msra.mxu0 %v90
    %129 = vmatprep.subr.mxu0 0.0
    %130 = vmatpush1.msra.mxu0 %v91
    %131 = vmatprep.subr.mxu0 0.0
    %132 = vmatpush1.msra.mxu0 0.0
    %133 = vmatprep.subr.mxu0 0.0
    %134 = vmatpush1.msra.mxu0 0.0
    %135 = vmatprep.subr.mxu0 0.0
    %136 = vmatpush1.msra.mxu0 0.0
    %137 = vmatprep.subr.mxu0 0.0
    %138 = vmatpush1.msra.mxu0 0.0
    %139 = vmatprep.subr.mxu0 0.0
    %140 = vmatpush1.msra.mxu0 0.0
    %141 = vmatprep.subr.mxu0 0.0
    %142 = vmatpush1.msra.mxu0 0.0
    %143 = vmatprep.subr.mxu0 0.0
    %144 = vmatpush1.msra.mxu0 0.0
    %145 = vmatprep.subr.mxu0 0.0
    %146 = vmatpush1.msra.mxu0 0.0
    %147 = vmatprep.subr.mxu0 0.0
    %148 = vmatpush1.msra.mxu0 0.0
    %149 = vmatprep.subr.mxu0 0.0
    %150 = vmatpush1.msra.mxu0 0.0
    %151 = vmatprep.subr.mxu0 0.0
    %152 = vmatpush1.msra.mxu0 0.0
    %153 = vmatprep.subr.mxu0 0.0
    %154 = vmatpush1.msra.mxu0 0.0
    %155 = vmatprep.subr.mxu0 0.0
    %156 = vmatpush1.msra.mxu0 0.0
    %157 = vmatprep.subr.mxu0 0.0
    %158 = vmatpush1.msra.mxu0 0.0
    %159 = vmatprep.subr.mxu0 0.0
    %160 = vmatpush1.msra.mxu0 0.0
    %161 = vmatprep.subr.mxu0 0.0
    %162 = vmatpush1.msra.mxu0 0.0
    %163 = vmatprep.mubr.f32.mxu0 0.0
    %164 = vmatmul.mubr.f32.gmra.mrb[0].mxu0 %v75
    %v165 = vpop.f32.mrb[0].mxu0
    %v166 = vadd.f32 %v97, %v165
    %v167 = vpop.f32.mrb[0].mxu0
    %168 = vdwg.mxu0
    %v169 = vmax.f32 %v166, 0.0
    %v170 = vld [vmem:[#allocation8] sm:$0xff]
    %v171 = vld [vmem:[#allocation8 + $0x8] sm:$0xff]
    %v172 = vld [vmem:[#allocation8 + $0x10] sm:$0xff]
    %v173 = vld [vmem:[#allocation8 + $0x18] sm:$0xff]
    %v174 = vld [vmem:[#allocation8 + $0x20] sm:$0xff]
    %v175 = vld [vmem:[#allocation8 + $0x28] sm:$0xff]
    %v176 = vld [vmem:[#allocation8 + $0x30] sm:$0xff]
    %v177 = vld [vmem:[#allocation8 + $0x38] sm:$0xff]
    %v178 = vld [vmem:[#allocation8 + $0x40] sm:$0xff]
    %v179 = vld [vmem:[#allocation8 + $0x48] sm:$0xff]
    %v180 = vld [vmem:[#allocation8 + $0x50] sm:$0xff]
    %v181 = vld [vmem:[#allocation8 + $0x58] sm:$0xff]
    %v182 = vld [vmem:[#allocation8 + $0x60] sm:$0xff]
    %v183 = vld [vmem:[#allocation8 + $0x68] sm:$0xff]
    %v184 = vld [vmem:[#allocation8 + $0x70] sm:$0xff]
    %v185 = vld [vmem:[#allocation8 + $0x78] sm:$0xff]
    %v186 = vld [vmem:[#allocation8 + $0x80] sm:$0xff]
    %v187 = vld [vmem:[#allocation8 + $0x88] sm:$0xff]
    %v188 = vld [vmem:[#allocation8 + $0x90] sm:$0xff]
    %v189 = vld [vmem:[#allocation8 + $0x98] sm:$0xff]
    %v190 = vld [vmem:[#allocation8 + $0xa0] sm:$0xff]
    %v191 = vld [vmem:[#allocation8 + $0xa8] sm:$0xff]
    %v192 = vld [vmem:[#allocation8 + $0xb0] sm:$0xff]
    %v193 = vld [vmem:[#allocation8 + $0xb8] sm:$0xff]
    %v194 = vld [vmem:[#allocation8 + $0xc0] sm:$0xff]
    %v195 = vld [vmem:[#allocation8 + $0xc8] sm:$0xff]
    %v196 = vld [vmem:[#allocation8 + $0xd0] sm:$0xff]
    %v197 = vld [vmem:[#allocation8 + $0xd8] sm:$0xff]
    %v198 = vld [vmem:[#allocation8 + $0xe0] sm:$0xff]
    %v199 = vld [vmem:[#allocation8 + $0xe8] sm:$0xff]
    %v200 = vld [vmem:[#allocation8 + $0xf0] sm:$0xff]
    %v201 = vld [vmem:[#allocation8 + $0xf8] sm:$0xff]
    %v202 = vld [vmem:[%s5] sm:$0x3]
    %v204 = vlaneseq
    %v205 = vshrl.u32 %v204, 7
    %v206 = vsub.s32 0, %v205
    %v207 = vrot.slane %v202, %v206
    %v208 = vlaneseq
    %v209 = vshrl.u32 %v208, 7
    %v210 = vsub.s32 1, %v209
    %v211 = vrot.slane %v202, %v210
    %214 = vmatprep.subr.mxu0 %v171
    %215 = vmatpush1.msra.mxu0 %v170
    %216 = vmatprep.subr.mxu0 %v173
    %217 = vmatpush1.msra.mxu0 %v172
    %218 = vmatprep.subr.mxu0 %v175
    %219 = vmatpush1.msra.mxu0 %v174
    %220 = vmatprep.subr.mxu0 %v177
    %221 = vmatpush1.msra.mxu0 %v176
    %222 = vmatprep.subr.mxu0 %v179
    %223 = vmatpush1.msra.mxu0 %v178
    %224 = vmatprep.subr.mxu0 %v181
    %225 = vmatpush1.msra.mxu0 %v180
    %226 = vmatprep.subr.mxu0 %v183
    %227 = vmatpush1.msra.mxu0 %v182
    %228 = vmatprep.subr.mxu0 %v185
    %229 = vmatpush1.msra.mxu0 %v184
    %230 = vmatprep.subr.mxu0 %v187
    %231 = vmatpush1.msra.mxu0 %v186
    %232 = vmatprep.subr.mxu0 %v189
    %233 = vmatpush1.msra.mxu0 %v188
    %234 = vmatprep.subr.mxu0 %v191
    %235 = vmatpush1.msra.mxu0 %v190
    %236 = vmatprep.subr.mxu0 %v193
    %237 = vmatpush1.msra.mxu0 %v192
    %238 = vmatprep.subr.mxu0 %v195
    %239 = vmatpush1.msra.mxu0 %v194
    %240 = vmatprep.subr.mxu0 %v197
    %241 = vmatpush1.msra.mxu0 %v196
    %242 = vmatprep.subr.mxu0 %v199
    %243 = vmatpush1.msra.mxu0 %v198
    %244 = vmatprep.subr.mxu0 %v201
    %245 = vmatpush1.msra.mxu0 %v200
    %246 = vmatprep.subr.mxu0 0.0
    %247 = vmatpush1.msra.mxu0 0.0
    %248 = vmatprep.subr.mxu0 0.0
    %249 = vmatpush1.msra.mxu0 0.0
    %250 = vmatprep.subr.mxu0 0.0
    %251 = vmatpush1.msra.mxu0 0.0
    %252 = vmatprep.subr.mxu0 0.0
    %253 = vmatpush1.msra.mxu0 0.0
    %254 = vmatprep.subr.mxu0 0.0
    %255 = vmatpush1.msra.mxu0 0.0
    %256 = vmatprep.subr.mxu0 0.0
    %257 = vmatpush1.msra.mxu0 0.0
    %258 = vmatprep.subr.mxu0 0.0
    %259 = vmatpush1.msra.mxu0 0.0
    %260 = vmatprep.subr.mxu0 0.0
    %261 = vmatpush1.msra.mxu0 0.0
    %262 = vmatprep.subr.mxu0 0.0
    %263 = vmatpush1.msra.mxu0 0.0
    %264 = vmatprep.subr.mxu0 0.0
    %265 = vmatpush1.msra.mxu0 0.0
    %266 = vmatprep.subr.mxu0 0.0
    %267 = vmatpush1.msra.mxu0 0.0
    %268 = vmatprep.subr.mxu0 0.0
    %269 = vmatpush1.msra.mxu0 0.0
    %270 = vmatprep.subr.mxu0 0.0
    %271 = vmatpush1.msra.mxu0 0.0
    %272 = vmatprep.subr.mxu0 0.0
    %273 = vmatpush1.msra.mxu0 0.0
    %274 = vmatprep.subr.mxu0 0.0
    %275 = vmatpush1.msra.mxu0 0.0
    %276 = vmatprep.subr.mxu0 0.0
    %277 = vmatpush1.msra.mxu0 0.0
    %278 = vmatprep.mubr.f32.mxu0 0.0
    %279 = vmatmul.mubr.f32.gmra.mrb[0].mxu0 %v169
    %v280 = vpop.f32.mrb[0].mxu0
    %v281 = vadd.f32 %v207, %v280
    %v282 = vpop.f32.mrb[0].mxu0
    %v283 = vadd.f32 %v211, %v282
    %284 = vdwg.mxu0
    %v285 = vld [vmem:[#allocation2] sm:$0xff]
    %v286 = vmul.f32 %v281, %v285
    %v287 = vadd.f32 %v286, %v283
    %288 = vst [vmem:[#allocation10] sm:$0xff] %v287
    // Predicated region
    $region42: #{tpu_custom_call.1} parent=1 // pred_check
      _
    $region43: #{tpu_custom_call.1} parent=1 // pred_check_branch
      %290 = sbr.rel (0) target = $region45
    $region44: #{tpu_custom_call.1} parent=1 // pred_region
      %s292 = ssub.s32 128, 128
      %293 = vsyncadd [#allocation4], %s292
      %s295 = sshll.u32 [#allocation10], 4
      %s296 = int_to_ptr.vmem [resolvable:$true] %s295
      %298 = dma.vmem_to_hbm [thread:$0]  %s296, 128, %s6, [#allocation4]
    $region45: #{tpu_custom_call.1} parent=1 // pred_fallthru
      _
    // Predicated region
    $region46: #{tpu_custom_call.1} parent=1 // pred_check
      _
    $region47: #{tpu_custom_call.1} parent=1 // pred_check_branch
      %300 = sbr.rel (0) target = $region49
    $region48: #{tpu_custom_call.1} parent=1 // pred_region
      %301 = dma.done [#allocation4], 128
    $region49: #{tpu_custom_call.1} parent=1 // pred_fallthru
      _
    %302 = vsyncpa [#allocation3], 1
    %303 = vsyncpa [#allocation6], 1
    %304 = vsyncpa [#allocation9], 1
    %305 = vsyncpa [#allocation4], 1

</llo_original>
